<compile_context>
chip_gen: v5e
topology: v5e:2x2
jax: 0.10.0
libtpu: 0.0.40
codegen_flags: <defaults>
</compile_context>

<pallas_src>
import jax
import jax.numpy as jnp
import numpy as np
from jax.experimental import pallas as pl
from jax.experimental.pallas import tpu as pltpu


def _nested_lstm_kernel(act_ref, WU_ref, b_ref, WUn_ref, bn_ref, out_ref):
    N = act_ref.shape[-1] // 4
    mxu_dtype = WU_ref.dtype            # f32 or bf16 (matmul operand dtype)

    acts = act_ref[...]                 # (bm, 4N) f32: [x | old_h | old_c | old_c_hat]
    xh = acts[:, 0:2 * N]               # outer-cell LHS, already contiguous
    old_c = acts[:, 2 * N:3 * N]
    old_c_hat = acts[:, 3 * N:4 * N]

    # ---- outer NestedLSTM cell: one (bm,2N) x (2N,4N) matmul for all 4 gates.
    g_out = jnp.dot(xh.astype(mxu_dtype), WU_ref[...],
                    preferred_element_type=jnp.float32) + b_ref[...]   # (bm,4N) f32

    i = jax.nn.sigmoid(g_out[:, 0 * N:1 * N])
    f = jax.nn.sigmoid(g_out[:, 1 * N:2 * N])
    g = jnp.tanh(g_out[:, 2 * N:3 * N])
    o = jax.nn.sigmoid(g_out[:, 3 * N:4 * N])   # outer output gate (independent
                                                # of the inner cell -> fused here)

    old_h_hat = f * old_c
    x_hat = i * g

    # ---- inner (nested) vanilla LSTM: forward(x_hat, old_h_hat, old_c_hat).
    xh2 = jnp.concatenate([x_hat, old_h_hat], axis=-1).astype(mxu_dtype)
    g_in = jnp.dot(xh2, WUn_ref[...],
                   preferred_element_type=jnp.float32) + bn_ref[...]   # (bm,4N)

    i2 = jax.nn.sigmoid(g_in[:, 0 * N:1 * N])
    f2 = jax.nn.sigmoid(g_in[:, 1 * N:2 * N])
    g2 = jnp.tanh(g_in[:, 2 * N:3 * N])
    o2 = jax.nn.sigmoid(g_in[:, 3 * N:4 * N])

    c_hat = f2 * old_c_hat + i2 * g2
    h_hat = o2 * jnp.tanh(c_hat)

    # ---- outer outputs, written as one lane-dense (bm, 3N) slab.
    c = h_hat
    h = o * jnp.tanh(c)
    out_ref[...] = jnp.concatenate([h, c, c_hat], axis=-1).astype(out_ref.dtype)


def _pack_gate_weights(W, U, b, mxu_dtype):
    """(4,N,N)/(4,N,N)/(4,1,N) -> ([W;U] as (2N,4N), b as (1,4N)).

    Column block k of the packed matrix is [W[k]; U[k]], so
    [x | h] @ packed gives x@W[k] + h@U[k] in lanes [k*N, (k+1)*N).
    """
    G, N, _ = W.shape
    Wcat = jnp.transpose(W, (1, 0, 2)).reshape(N, G * N)
    Ucat = jnp.transpose(U, (1, 0, 2)).reshape(N, G * N)
    WU = jnp.concatenate([Wcat, Ucat], axis=0).astype(mxu_dtype)     # (2N, 4N)
    bcat = jnp.transpose(b, (1, 0, 2)).reshape(1, G * N).astype(jnp.float32)
    return WU, bcat


def pack_nested_lstm_params(W, U, b, Wn, Un, bn, *, weight_dtype=jnp.bfloat16):
    """One-time host-side weight repack.  Call once; reuse for every forward."""
    WU, bc = _pack_gate_weights(W, U, b, weight_dtype)
    WUn, bnc = _pack_gate_weights(Wn, Un, bn, weight_dtype)
    return WU, bc, WUn, bnc


def nested_lstm_forward(x, old_h, old_c, old_c_hat, packed_params, *, bm=None):
    """NestedLSTM.forward -> (h, c, c_hat), each (B, N).

    `packed_params` is the tuple returned by pack_nested_lstm_params().
    """
    B, N = x.shape
    WU, bc, WUn, bnc = packed_params

    if bm is None:
        if B <= 512:
            bm = B                                   # single pipeline step
        else:
            bm = next((t for t in (512, 256, 128) if B % t == 0), B)
    assert B % bm == 0, "batch must be divisible by the batch tile"
    assert bm == B or bm % 8 == 0, "batch tile must be a multiple of 8 (sublane rule)"

    # One lane-dense input slab: [x | old_h | old_c | old_c_hat]  -> (B, 4N).
    acts = jnp.concatenate([x, old_h, old_c, old_c_hat], axis=-1)

    act_spec = pl.BlockSpec((bm, 4 * N), lambda i: (i, 0))
    out_spec = pl.BlockSpec((bm, 3 * N), lambda i: (i, 0))
    # Weights/biases are grid-invariant (constant index_map) -> fetched once
    # and kept resident in VMEM across the batch grid.
    wu_spec = pl.BlockSpec((2 * N, 4 * N), lambda i: (0, 0))
    b_spec = pl.BlockSpec((1, 4 * N), lambda i: (0, 0))

    grid_n = B // bm
    wbytes = 2 * (2 * N) * (4 * N) * jnp.dtype(WU.dtype).itemsize + 2 * (4 * N) * 4
    abytes_per_step = bm * (4 * N + 3 * N) * 4
    # Only shard the batch axis across TensorCores when there is more than one
    # full-height tile AND activation traffic dominates the (per-core) weight
    # load; otherwise megacore sharding just duplicates the weight DMA.
    parallel_ok = grid_n > 1 and bm >= 128 and abytes_per_step >= wbytes
    semantics = ("parallel",) if parallel_ok else ("arbitrary",)

    cost = pl.CostEstimate(
        flops=2 * 2 * B * (2 * N) * (4 * N),          # two fused matmuls
        transcendentals=10 * B * N,                   # 6 sigmoid + 4 tanh maps
        bytes_accessed=wbytes + B * 7 * N * 4,
    )

    out = pl.pallas_call(
        _nested_lstm_kernel,
        out_shape=jax.ShapeDtypeStruct((B, 3 * N), x.dtype),
        grid_spec=pltpu.PrefetchScalarGridSpec(
            num_scalar_prefetch=0,
            grid=(grid_n,),
            in_specs=[act_spec, wu_spec, b_spec, wu_spec, b_spec],
            out_specs=out_spec,
        ),
        compiler_params=pltpu.CompilerParams(dimension_semantics=semantics),
        cost_estimate=cost,
    )(acts, WU, bc, WUn, bnc)

    h = out[:, 0 * N:1 * N]
    c = out[:, 1 * N:2 * N]
    c_hat = out[:, 2 * N:3 * N]
    return h, c, c_hat


def _reference(x, old_h, old_c, old_c_hat, W, U, b, Wn, Un, bn):
    sig, tanh = jax.nn.sigmoid, jnp.tanh
    g = lambda a, h, Wk, Uk, bk: a @ Wk + h @ Uk + bk
    i = sig(g(x, old_h, W[0], U[0], b[0]))
    f = sig(g(x, old_h, W[1], U[1], b[1]))
    old_h_hat = f * old_c
    x_hat = i * tanh(g(x, old_h, W[2], U[2], b[2]))
    i2 = sig(g(x_hat, old_h_hat, Wn[0], Un[0], bn[0]))
    f2 = sig(g(x_hat, old_h_hat, Wn[1], Un[1], bn[1]))
    c_hat = f2 * old_c_hat + i2 * tanh(g(x_hat, old_h_hat, Wn[2], Un[2], bn[2]))
    o2 = sig(g(x_hat, old_h_hat, Wn[3], Un[3], bn[3]))
    h_hat = o2 * tanh(c_hat)
    c = h_hat
    o = sig(g(x, old_h, W[3], U[3], b[3]))
    h = o * tanh(c)
    return h, c, c_hat


if __name__ == "__main__":
    B = 16                 # batch
    N = 128                # state_size == nested_state_size
    key = jax.random.PRNGKey(0)
    ks = jax.random.split(key, 8)
    std = 1.0 / float(np.sqrt(N))

    # Deterministic "normal(0, 1/sqrt(N))" parameter init, biases zero.
    W = std * jax.random.normal(ks[0], (4, N, N), jnp.float32)
    U = std * jax.random.normal(ks[1], (4, N, N), jnp.float32)
    b = jnp.zeros((4, 1, N), jnp.float32)
    Wn = std * jax.random.normal(ks[2], (4, N, N), jnp.float32)
    Un = std * jax.random.normal(ks[3], (4, N, N), jnp.float32)
    bn = jnp.zeros((4, 1, N), jnp.float32)

    x = jax.random.normal(ks[4], (B, N), jnp.float32)
    old_h = jax.random.normal(ks[5], (B, N), jnp.float32)
    old_c = jax.random.normal(ks[6], (B, N), jnp.float32)
    old_c_hat = jax.random.normal(ks[7], (B, N), jnp.float32)

    h_r, c_r, chat_r = _reference(x, old_h, old_c, old_c_hat, W, U, b, Wn, Un, bn)

    # 1) f32 weight path (opt-in): exact match with the reference.
    packed_f32 = pack_nested_lstm_params(W, U, b, Wn, Un, bn,
                                         weight_dtype=jnp.float32)
    h, c, c_hat = jax.block_until_ready(
        nested_lstm_forward(x, old_h, old_c, old_c_hat, packed_f32))
    np.testing.assert_allclose(np.asarray(h), np.asarray(h_r), atol=1e-5, rtol=1e-5)
    np.testing.assert_allclose(np.asarray(c), np.asarray(c_r), atol=1e-5, rtol=1e-5)
    np.testing.assert_allclose(np.asarray(c_hat), np.asarray(chat_r), atol=1e-5, rtol=1e-5)

    # 2) default bf16 matmul path (halves weight HBM traffic; bf16 MXU operands
    #    include activation quantization, accumulation/bias/elementwise stay f32).
    packed_bf16 = pack_nested_lstm_params(W, U, b, Wn, Un, bn)   # bf16 default
    h2, c2, c_hat2 = jax.block_until_ready(
        nested_lstm_forward(x, old_h, old_c, old_c_hat, packed_bf16))
    np.testing.assert_allclose(np.asarray(h2), np.asarray(h_r), atol=8e-2, rtol=8e-2)
    np.testing.assert_allclose(np.asarray(c2), np.asarray(c_r), atol=8e-2, rtol=8e-2)
    np.testing.assert_allclose(np.asarray(c_hat2), np.asarray(chat_r), atol=8e-2, rtol=8e-2)

    print("KERNEL_OK")
</pallas_src>

<mosaic_0001>
module attributes {stable_mosaic.version = 11 : i64} {
  func.func @_nested_lstm_kernel(%arg0: i32, %arg1: memref<16x512xf32, #tpu.memory_space<vmem>>, %arg2: memref<256x512xf32, #tpu.memory_space<vmem>>, %arg3: memref<1x512xf32, #tpu.memory_space<vmem>>, %arg4: memref<256x512xf32, #tpu.memory_space<vmem>>, %arg5: memref<1x512xf32, #tpu.memory_space<vmem>>, %arg6: memref<16x384xf32, #tpu.memory_space<vmem>>) attributes {dimension_semantics = [#tpu.dimension_semantics<arbitrary>], iteration_bounds = array<i64: 1>, scalar_prefetch = 0 : i64, scratch_operands = 0 : i64, tpu.core_type = #tpu.core_type<tc>, window_params = [{transform_indices = @transform_0, window_bounds = array<i64: 16, 512>}, {pipeline_mode = #tpu.pipeline_mode<synchronous>, transform_indices = @transform_1, window_bounds = array<i64: 256, 512>}, {pipeline_mode = #tpu.pipeline_mode<synchronous>, transform_indices = @transform_2, window_bounds = array<i64: 1, 512>}, {pipeline_mode = #tpu.pipeline_mode<synchronous>, transform_indices = @transform_3, window_bounds = array<i64: 256, 512>}, {pipeline_mode = #tpu.pipeline_mode<synchronous>, transform_indices = @transform_4, window_bounds = array<i64: 1, 512>}, {transform_indices = @transform_5, window_bounds = array<i64: 16, 384>}]} {
    %c0 = arith.constant 0 : index
    %c0_0 = arith.constant 0 : index
    %0 = vector.load %arg1[%c0, %c0_0] : memref<16x512xf32, #tpu.memory_space<vmem>>, vector<16x512xf32>
    %1 = vector.extract_strided_slice %0 {offsets = [0, 0], sizes = [16, 256], strides = [1, 1]} : vector<16x512xf32> to vector<16x256xf32>
    %2 = vector.extract_strided_slice %0 {offsets = [0, 256], sizes = [16, 128], strides = [1, 1]} : vector<16x512xf32> to vector<16x128xf32>
    %3 = vector.extract_strided_slice %0 {offsets = [0, 384], sizes = [16, 128], strides = [1, 1]} : vector<16x512xf32> to vector<16x128xf32>
    %c0_1 = arith.constant 0 : index
    %c0_2 = arith.constant 0 : index
    %4 = vector.load %arg2[%c0_1, %c0_2] : memref<256x512xf32, #tpu.memory_space<vmem>>, vector<256x512xf32>
    %cst = arith.constant dense<0.000000e+00> : vector<16x512xf32>
    %5 = tpu.matmul %1, %4, %cst {dimension_numbers = #tpu.dot_dimension_numbers<[1], [0], [0], [1], [0, 0, 1, 1], [], []>} : vector<16x256xf32>, vector<256x512xf32>, vector<16x512xf32> -> vector<16x512xf32>
    %c0_3 = arith.constant 0 : index
    %c0_4 = arith.constant 0 : index
    %6 = vector.load %arg3[%c0_3, %c0_4] : memref<1x512xf32, #tpu.memory_space<vmem>>, vector<1x512xf32>
    %7 = vector.broadcast %6 : vector<1x512xf32> to vector<16x512xf32>
    %8 = arith.addf %5, %7 : vector<16x512xf32>
    %9 = vector.extract_strided_slice %8 {offsets = [0, 0], sizes = [16, 128], strides = [1, 1]} : vector<16x512xf32> to vector<16x128xf32>
    %10 = arith.negf %9 : vector<16x128xf32>
    %11 = math.exp %10 : vector<16x128xf32>
    %cst_5 = arith.constant 1.000000e+00 : f32
    %12 = vector.broadcast %cst_5 : f32 to vector<16x128xf32>
    %13 = arith.addf %12, %11 : vector<16x128xf32>
    %14 = arith.divf %12, %13 : vector<16x128xf32>
    %15 = vector.extract_strided_slice %8 {offsets = [0, 128], sizes = [16, 128], strides = [1, 1]} : vector<16x512xf32> to vector<16x128xf32>
    %16 = arith.negf %15 : vector<16x128xf32>
    %17 = math.exp %16 : vector<16x128xf32>
    %cst_6 = arith.constant 1.000000e+00 : f32
    %18 = vector.broadcast %cst_6 : f32 to vector<16x128xf32>
    %19 = arith.addf %18, %17 : vector<16x128xf32>
    %20 = arith.divf %18, %19 : vector<16x128xf32>
    %21 = vector.extract_strided_slice %8 {offsets = [0, 256], sizes = [16, 128], strides = [1, 1]} : vector<16x512xf32> to vector<16x128xf32>
    %22 = math.tanh %21 : vector<16x128xf32>
    %23 = vector.extract_strided_slice %8 {offsets = [0, 384], sizes = [16, 128], strides = [1, 1]} : vector<16x512xf32> to vector<16x128xf32>
    %24 = arith.negf %23 : vector<16x128xf32>
    %25 = math.exp %24 : vector<16x128xf32>
    %cst_7 = arith.constant 1.000000e+00 : f32
    %26 = vector.broadcast %cst_7 : f32 to vector<16x128xf32>
    %27 = arith.addf %26, %25 : vector<16x128xf32>
    %28 = arith.divf %26, %27 : vector<16x128xf32>
    %29 = arith.mulf %20, %2 : vector<16x128xf32>
    %30 = arith.mulf %14, %22 : vector<16x128xf32>
    %31 = tpu.concatenate %30, %29 in 1 : vector<16x128xf32>, vector<16x128xf32> -> vector<16x256xf32>
    %c0_8 = arith.constant 0 : index
    %c0_9 = arith.constant 0 : index
    %32 = vector.load %arg4[%c0_8, %c0_9] : memref<256x512xf32, #tpu.memory_space<vmem>>, vector<256x512xf32>
    %cst_10 = arith.constant dense<0.000000e+00> : vector<16x512xf32>
    %33 = tpu.matmul %31, %32, %cst_10 {dimension_numbers = #tpu.dot_dimension_numbers<[1], [0], [0], [1], [0, 0, 1, 1], [], []>} : vector<16x256xf32>, vector<256x512xf32>, vector<16x512xf32> -> vector<16x512xf32>
    %c0_11 = arith.constant 0 : index
    %c0_12 = arith.constant 0 : index
    %34 = vector.load %arg5[%c0_11, %c0_12] : memref<1x512xf32, #tpu.memory_space<vmem>>, vector<1x512xf32>
    %35 = vector.broadcast %34 : vector<1x512xf32> to vector<16x512xf32>
    %36 = arith.addf %33, %35 : vector<16x512xf32>
    %37 = vector.extract_strided_slice %36 {offsets = [0, 0], sizes = [16, 128], strides = [1, 1]} : vector<16x512xf32> to vector<16x128xf32>
    %38 = arith.negf %37 : vector<16x128xf32>
    %39 = math.exp %38 : vector<16x128xf32>
    %cst_13 = arith.constant 1.000000e+00 : f32
    %40 = vector.broadcast %cst_13 : f32 to vector<16x128xf32>
    %41 = arith.addf %40, %39 : vector<16x128xf32>
    %42 = arith.divf %40, %41 : vector<16x128xf32>
    %43 = vector.extract_strided_slice %36 {offsets = [0, 128], sizes = [16, 128], strides = [1, 1]} : vector<16x512xf32> to vector<16x128xf32>
    %44 = arith.negf %43 : vector<16x128xf32>
    %45 = math.exp %44 : vector<16x128xf32>
    %cst_14 = arith.constant 1.000000e+00 : f32
    %46 = vector.broadcast %cst_14 : f32 to vector<16x128xf32>
    %47 = arith.addf %46, %45 : vector<16x128xf32>
    %48 = arith.divf %46, %47 : vector<16x128xf32>
    %49 = vector.extract_strided_slice %36 {offsets = [0, 256], sizes = [16, 128], strides = [1, 1]} : vector<16x512xf32> to vector<16x128xf32>
    %50 = math.tanh %49 : vector<16x128xf32>
    %51 = vector.extract_strided_slice %36 {offsets = [0, 384], sizes = [16, 128], strides = [1, 1]} : vector<16x512xf32> to vector<16x128xf32>
    %52 = arith.negf %51 : vector<16x128xf32>
    %53 = math.exp %52 : vector<16x128xf32>
    %cst_15 = arith.constant 1.000000e+00 : f32
    %54 = vector.broadcast %cst_15 : f32 to vector<16x128xf32>
    %55 = arith.addf %54, %53 : vector<16x128xf32>
    %56 = arith.divf %54, %55 : vector<16x128xf32>
    %57 = arith.mulf %48, %3 : vector<16x128xf32>
    %58 = arith.mulf %42, %50 : vector<16x128xf32>
    %59 = arith.addf %57, %58 : vector<16x128xf32>
    %60 = math.tanh %59 : vector<16x128xf32>
    %61 = arith.mulf %56, %60 : vector<16x128xf32>
    %62 = math.tanh %61 : vector<16x128xf32>
    %63 = arith.mulf %28, %62 : vector<16x128xf32>
    %64 = tpu.concatenate %63, %61, %59 in 1 : vector<16x128xf32>, vector<16x128xf32>, vector<16x128xf32> -> vector<16x384xf32>
    %c0_16 = arith.constant 0 : index
    %c0_17 = arith.constant 0 : index
    %65 = vector.load %arg6[%c0_16, %c0_17] : memref<16x384xf32, #tpu.memory_space<vmem>>, vector<16x384xf32>
    tpu.vector_store %arg6[%c0_16, %c0_17], %64 {strides = array<i32>} : memref<16x384xf32, #tpu.memory_space<vmem>>, vector<16x384xf32>,
    return
  }
  func.func @transform_0(%arg0: i32) -> (i32, i32) {
    %c0_i32 = arith.constant 0 : i32
    %c0_i32_0 = arith.constant 0 : i32
    return %arg0, %c0_i32 : i32, i32
  }
  func.func @transform_1(%arg0: i32) -> (i32, i32) {
    %c0_i32 = arith.constant 0 : i32
    %c0_i32_0 = arith.constant 0 : i32
    %c0_i32_1 = arith.constant 0 : i32
    return %c0_i32, %c0_i32_0 : i32, i32
  }
  func.func @transform_2(%arg0: i32) -> (i32, i32) {
    %c0_i32 = arith.constant 0 : i32
    %c0_i32_0 = arith.constant 0 : i32
    %c0_i32_1 = arith.constant 0 : i32
    return %c0_i32, %c0_i32_0 : i32, i32
  }
  func.func @transform_3(%arg0: i32) -> (i32, i32) {
    %c0_i32 = arith.constant 0 : i32
    %c0_i32_0 = arith.constant 0 : i32
    %c0_i32_1 = arith.constant 0 : i32
    return %c0_i32, %c0_i32_0 : i32, i32
  }
  func.func @transform_4(%arg0: i32) -> (i32, i32) {
    %c0_i32 = arith.constant 0 : i32
    %c0_i32_0 = arith.constant 0 : i32
    %c0_i32_1 = arith.constant 0 : i32
    return %c0_i32, %c0_i32_0 : i32, i32
  }
  func.func @transform_5(%arg0: i32) -> (i32, i32) {
    %c0_i32 = arith.constant 0 : i32
    %c0_i32_0 = arith.constant 0 : i32
    return %arg0, %c0_i32 : i32, i32
  }
}

</mosaic_0001>

<llo_original>
// kernel: tpu_custom_call.1
$region0: #{tpu_custom_call.1}
  #allocation0 [shape = 'u32[]', space=smem, size = 0x4, offset = 0x4, fixed_abs, tag = 'smem constant byte address 0x4 - core index']
  #allocation1 [shape = 'u32[72,128]{1,0:T(1,128)}', space=vmem, size = 0x9000, scoped, tag = 'internal scratch']
  %s0 = inlined_call_operand.hbm [shape: f32[16,512], index: 0, kind: input, shape index: {}]
  %s1 = inlined_call_operand.hbm [shape: f32[256,512], index: 1, kind: input, shape index: {}]
  %s2 = inlined_call_operand.hbm [shape: f32[1,512], index: 2, kind: input, shape index: {}]
  %s3 = inlined_call_operand.hbm [shape: f32[256,512], index: 3, kind: input, shape index: {}]
  %s4 = inlined_call_operand.hbm [shape: f32[1,512], index: 4, kind: input, shape index: {}]
  %s5 = inlined_call_operand.hbm [shape: f32[16,384], index: 5, kind: output, shape index: {}]
  %s6 = sld [smem:[#allocation0]]
  $region50: #{tpu_custom_call.1} parent=0
    _
  %s8 = ssub.s32 1, %s6
  %s9 = scalar_select 0, %s8, %s6
  $region1: #{tpu_custom_call.1} parent=0
    #allocation2 [shape = 'u8[32768]{0}', space=vmem, size = 0x8000, scoped, tag = 'input window, operand 0, single buffered']
    #allocation3 [shape = 's32[1]{0}', space=sflag, size = 0x4, scoped, tag = 'scoped memory for tpu_custom_call.1']
    #allocation4 [shape = 's32[1]{0}', space=sflag, size = 0x4, scoped, tag = 'scoped memory for tpu_custom_call.1']
    #allocation5 [shape = 'u8[524288]{0}', space=vmem, size = 0x80000, scoped, tag = 'input window, operand 1, single buffered']
    #allocation6 [shape = 's32[1]{0}', space=sflag, size = 0x4, scoped, tag = 'scoped memory for tpu_custom_call.1']
    #allocation7 [shape = 'u8[2048]{0}', space=vmem, size = 0x800, scoped, tag = 'input window, operand 2, single buffered']
    #allocation8 [shape = 'u8[524288]{0}', space=vmem, size = 0x80000, scoped, tag = 'input window, operand 3, single buffered']
    #allocation9 [shape = 's32[1]{0}', space=sflag, size = 0x4, scoped, tag = 'scoped memory for tpu_custom_call.1']
    #allocation10 [shape = 'u8[2048]{0}', space=vmem, size = 0x800, scoped, tag = 'input window, operand 4, single buffered']
    #allocation11 [shape = 'u8[24576]{0}', space=vmem, size = 0x6000, scoped, tag = 'output window, operand 0, single buffered']
    %10 = vsyncpa [#allocation3], 0
    %11 = vsyncpa [#allocation6], 0
    %12 = vsyncpa [#allocation9], 0
    %13 = vsyncpa [#allocation4], 0
    // Predicated region
    $region2: #{tpu_custom_call.1} parent=1 // pred_check
      _
    $region3: #{tpu_custom_call.1} parent=1 // pred_check_branch
      %15 = sbr.rel (0) target = $region5
    $region4: #{tpu_custom_call.1} parent=1 // pred_region
      %17 = vsyncadd [#allocation3], 0
      %s18 = sshll.u32 %s0, 4
      %s19 = int_to_ptr.hbm [resolvable:$true] %s18
      %s20 = sshll.u32 [#allocation2], 4
      %s21 = int_to_ptr.vmem [resolvable:$true] %s20
      %26 = dma.hbm_to_vmem [thread:$0]  %s19, 1024, %s21, [#allocation3], 512, 512, 32
    $region5: #{tpu_custom_call.1} parent=1 // pred_fallthru
      _
    // Predicated region
    $region6: #{tpu_custom_call.1} parent=1 // pred_check
      _
    $region7: #{tpu_custom_call.1} parent=1 // pred_check_branch
      %28 = sbr.rel (0) target = $region9
    $region8: #{tpu_custom_call.1} parent=1 // pred_region
      %30 = vsyncadd [#allocation6], 0
      %s31 = sshll.u32 %s1, 4
      %s32 = int_to_ptr.hbm [resolvable:$true] %s31
      %s33 = sshll.u32 [#allocation5], 4
      %s34 = int_to_ptr.vmem [resolvable:$true] %s33
      %39 = dma.hbm_to_vmem [thread:$0]  %s32, 16384, %s34, [#allocation6], 512, 512, 32
    $region9: #{tpu_custom_call.1} parent=1 // pred_fallthru
      _
    // Predicated region
    $region10: #{tpu_custom_call.1} parent=1 // pred_check
      _
    $region11: #{tpu_custom_call.1} parent=1 // pred_check_branch
      %41 = sbr.rel (0) target = $region13
    $region12: #{tpu_custom_call.1} parent=1 // pred_region
      %43 = vsyncadd [#allocation6], 0
      %s45 = sshll.u32 %s2, 4
      %s46 = int_to_ptr.hbm [resolvable:$true] %s45
      %s47 = sshll.u32 [#allocation7], 4
      %s48 = int_to_ptr.vmem [resolvable:$true] %s47
      %50 = dma.hbm_to_vmem [thread:$0]  %s46, 64, %s48, [#allocation6]
    $region13: #{tpu_custom_call.1} parent=1 // pred_fallthru
      _
    // Predicated region
    $region14: #{tpu_custom_call.1} parent=1 // pred_check
      _
    $region15: #{tpu_custom_call.1} parent=1 // pred_check_branch
      %52 = sbr.rel (0) target = $region17
    $region16: #{tpu_custom_call.1} parent=1 // pred_region
      %54 = vsyncadd [#allocation9], 0
      %s55 = sshll.u32 %s3, 4
      %s56 = int_to_ptr.hbm [resolvable:$true] %s55
      %s57 = sshll.u32 [#allocation8], 4
      %s58 = int_to_ptr.vmem [resolvable:$true] %s57
      %63 = dma.hbm_to_vmem [thread:$0]  %s56, 16384, %s58, [#allocation9], 512, 512, 32
    $region17: #{tpu_custom_call.1} parent=1 // pred_fallthru
      _
    // Predicated region
    $region18: #{tpu_custom_call.1} parent=1 // pred_check
      _
    $region19: #{tpu_custom_call.1} parent=1 // pred_check_branch
      %65 = sbr.rel (0) target = $region21
    $region20: #{tpu_custom_call.1} parent=1 // pred_region
      %67 = vsyncadd [#allocation9], 0
      %s69 = sshll.u32 %s4, 4
      %s70 = int_to_ptr.hbm [resolvable:$true] %s69
      %s71 = sshll.u32 [#allocation10], 4
      %s72 = int_to_ptr.vmem [resolvable:$true] %s71
      %74 = dma.hbm_to_vmem [thread:$0]  %s70, 64, %s72, [#allocation9]
    $region21: #{tpu_custom_call.1} parent=1 // pred_fallthru
      _
    // Predicated region
    $region22: #{tpu_custom_call.1} parent=1 // pred_check
      _
    $region23: #{tpu_custom_call.1} parent=1 // pred_check_branch
      %76 = sbr.rel (0) target = $region25
    $region24: #{tpu_custom_call.1} parent=1 // pred_region
      %78 = dma.done [#allocation3], 1024
    $region25: #{tpu_custom_call.1} parent=1 // pred_fallthru
      _
    // Predicated region
    $region26: #{tpu_custom_call.1} parent=1 // pred_check
      _
    $region27: #{tpu_custom_call.1} parent=1 // pred_check_branch
      %80 = sbr.rel (0) target = $region29
    $region28: #{tpu_custom_call.1} parent=1 // pred_region
      %82 = dma.done [#allocation6], 16384
    $region29: #{tpu_custom_call.1} parent=1 // pred_fallthru
      _
    // Predicated region
    $region30: #{tpu_custom_call.1} parent=1 // pred_check
      _
    $region31: #{tpu_custom_call.1} parent=1 // pred_check_branch
      %84 = sbr.rel (0) target = $region33
    $region32: #{tpu_custom_call.1} parent=1 // pred_region
      %86 = dma.done [#allocation6], 64
    $region33: #{tpu_custom_call.1} parent=1 // pred_fallthru
      _
    // Predicated region
    $region34: #{tpu_custom_call.1} parent=1 // pred_check
      _
    $region35: #{tpu_custom_call.1} parent=1 // pred_check_branch
      %88 = sbr.rel (0) target = $region37
    $region36: #{tpu_custom_call.1} parent=1 // pred_region
      %90 = dma.done [#allocation9], 16384
    $region37: #{tpu_custom_call.1} parent=1 // pred_fallthru
      _
    // Predicated region
    $region38: #{tpu_custom_call.1} parent=1 // pred_check
      _
    $region39: #{tpu_custom_call.1} parent=1 // pred_check_branch
      %92 = sbr.rel (0) target = $region41
    $region40: #{tpu_custom_call.1} parent=1 // pred_region
      %94 = dma.done [#allocation9], 64
    $region41: #{tpu_custom_call.1} parent=1 // pred_fallthru
      _
    %v95 = vld [vmem:[#allocation2] sm:$0xff]
    %v96 = vld [vmem:[#allocation2 + $0x8] sm:$0xff]
    %v97 = vld [vmem:[#allocation2 + $0x10] sm:$0xff]
    %v98 = vld [vmem:[#allocation2 + $0x18] sm:$0xff]
    %v99 = vld [vmem:[#allocation2 + $0x20] sm:$0xff]
    %v100 = vld [vmem:[#allocation2 + $0x28] sm:$0xff]
    %v101 = vld [vmem:[#allocation2 + $0x30] sm:$0xff]
    %v102 = vld [vmem:[#allocation2 + $0x38] sm:$0xff]
    %v103 = vld [vmem:[#allocation5] sm:$0xff]
    %v104 = vld [vmem:[#allocation5 + $0x8] sm:$0xff]
    %v105 = vld [vmem:[#allocation5 + $0x10] sm:$0xff]
    %v106 = vld [vmem:[#allocation5 + $0x18] sm:$0xff]
    %v107 = vld [vmem:[#allocation5 + $0x20] sm:$0xff]
    %v108 = vld [vmem:[#allocation5 + $0x28] sm:$0xff]
    %v109 = vld [vmem:[#allocation5 + $0x30] sm:$0xff]
    %v110 = vld [vmem:[#allocation5 + $0x38] sm:$0xff]
    %v111 = vld [vmem:[#allocation5 + $0x40] sm:$0xff]
    %v112 = vld [vmem:[#allocation5 + $0x48] sm:$0xff]
    %v113 = vld [vmem:[#allocation5 + $0x50] sm:$0xff]
    %v114 = vld [vmem:[#allocation5 + $0x58] sm:$0xff]
    %v115 = vld [vmem:[#allocation5 + $0x60] sm:$0xff]
    %v116 = vld [vmem:[#allocation5 + $0x68] sm:$0xff]
    %v117 = vld [vmem:[#allocation5 + $0x70] sm:$0xff]
    %v118 = vld [vmem:[#allocation5 + $0x78] sm:$0xff]
    %v119 = vld [vmem:[#allocation5 + $0x80] sm:$0xff]
    %v120 = vld [vmem:[#allocation5 + $0x88] sm:$0xff]
    %v121 = vld [vmem:[#allocation5 + $0x90] sm:$0xff]
    %v122 = vld [vmem:[#allocation5 + $0x98] sm:$0xff]
    %v123 = vld [vmem:[#allocation5 + $0xa0] sm:$0xff]
    %v124 = vld [vmem:[#allocation5 + $0xa8] sm:$0xff]
    %v125 = vld [vmem:[#allocation5 + $0xb0] sm:$0xff]
    %v126 = vld [vmem:[#allocation5 + $0xb8] sm:$0xff]
    %v127 = vld [vmem:[#allocation5 + $0xc0] sm:$0xff]
    %v128 = vld [vmem:[#allocation5 + $0xc8] sm:$0xff]
    %v129 = vld [vmem:[#allocation5 + $0xd0] sm:$0xff]
    %v130 = vld [vmem:[#allocation5 + $0xd8] sm:$0xff]
    %v131 = vld [vmem:[#allocation5 + $0xe0] sm:$0xff]
    %v132 = vld [vmem:[#allocation5 + $0xe8] sm:$0xff]
    %v133 = vld [vmem:[#allocation5 + $0xf0] sm:$0xff]
    %v134 = vld [vmem:[#allocation5 + $0xf8] sm:$0xff]
    %v135 = vld [vmem:[#allocation5 + $0x100] sm:$0xff]
    %v136 = vld [vmem:[#allocation5 + $0x108] sm:$0xff]
    %v137 = vld [vmem:[#allocation5 + $0x110] sm:$0xff]
    %v138 = vld [vmem:[#allocation5 + $0x118] sm:$0xff]
    %v139 = vld [vmem:[#allocation5 + $0x120] sm:$0xff]
    %v140 = vld [vmem:[#allocation5 + $0x128] sm:$0xff]
    %v141 = vld [vmem:[#allocation5 + $0x130] sm:$0xff]
    %v142 = vld [vmem:[#allocation5 + $0x138] sm:$0xff]
    %v143 = vld [vmem:[#allocation5 + $0x140] sm:$0xff]
    %v144 = vld [vmem:[#allocation5 + $0x148] sm:$0xff]
    %v145 = vld [vmem:[#allocation5 + $0x150] sm:$0xff]
    %v146 = vld [vmem:[#allocation5 + $0x158] sm:$0xff]
    %v147 = vld [vmem:[#allocation5 + $0x160] sm:$0xff]
    %v148 = vld [vmem:[#allocation5 + $0x168] sm:$0xff]
    %v149 = vld [vmem:[#allocation5 + $0x170] sm:$0xff]
    %v150 = vld [vmem:[#allocation5 + $0x178] sm:$0xff]
    %v151 = vld [vmem:[#allocation5 + $0x180] sm:$0xff]
    %v152 = vld [vmem:[#allocation5 + $0x188] sm:$0xff]
    %v153 = vld [vmem:[#allocation5 + $0x190] sm:$0xff]
    %v154 = vld [vmem:[#allocation5 + $0x198] sm:$0xff]
    %v155 = vld [vmem:[#allocation5 + $0x1a0] sm:$0xff]
    %v156 = vld [vmem:[#allocation5 + $0x1a8] sm:$0xff]
    %v157 = vld [vmem:[#allocation5 + $0x1b0] sm:$0xff]
    %v158 = vld [vmem:[#allocation5 + $0x1b8] sm:$0xff]
    %v159 = vld [vmem:[#allocation5 + $0x1c0] sm:$0xff]
    %v160 = vld [vmem:[#allocation5 + $0x1c8] sm:$0xff]
    %v161 = vld [vmem:[#allocation5 + $0x1d0] sm:$0xff]
    %v162 = vld [vmem:[#allocation5 + $0x1d8] sm:$0xff]
    %v163 = vld [vmem:[#allocation5 + $0x1e0] sm:$0xff]
    %v164 = vld [vmem:[#allocation5 + $0x1e8] sm:$0xff]
    %v165 = vld [vmem:[#allocation5 + $0x1f0] sm:$0xff]
    %v166 = vld [vmem:[#allocation5 + $0x1f8] sm:$0xff]
    %v167 = vld [vmem:[#allocation5 + $0x200] sm:$0xff]
    %v168 = vld [vmem:[#allocation5 + $0x208] sm:$0xff]
    %v169 = vld [vmem:[#allocation5 + $0x210] sm:$0xff]
    %v170 = vld [vmem:[#allocation5 + $0x218] sm:$0xff]
    %v171 = vld [vmem:[#allocation5 + $0x220] sm:$0xff]
    %v172 = vld [vmem:[#allocation5 + $0x228] sm:$0xff]
    %v173 = vld [vmem:[#allocation5 + $0x230] sm:$0xff]
    %v174 = vld [vmem:[#allocation5 + $0x238] sm:$0xff]
    %v175 = vld [vmem:[#allocation5 + $0x240] sm:$0xff]
    %v176 = vld [vmem:[#allocation5 + $0x248] sm:$0xff]
    %v177 = vld [vmem:[#allocation5 + $0x250] sm:$0xff]
    %v178 = vld [vmem:[#allocation5 + $0x258] sm:$0xff]
    %v179 = vld [vmem:[#allocation5 + $0x260] sm:$0xff]
    %v180 = vld [vmem:[#allocation5 + $0x268] sm:$0xff]
    %v181 = vld [vmem:[#allocation5 + $0x270] sm:$0xff]
    %v182 = vld [vmem:[#allocation5 + $0x278] sm:$0xff]
    %v183 = vld [vmem:[#allocation5 + $0x280] sm:$0xff]
    %v184 = vld [vmem:[#allocation5 + $0x288] sm:$0xff]
    %v185 = vld [vmem:[#allocation5 + $0x290] sm:$0xff]
    %v186 = vld [vmem:[#allocation5 + $0x298] sm:$0xff]
    %v187 = vld [vmem:[#allocation5 + $0x2a0] sm:$0xff]
    %v188 = vld [vmem:[#allocation5 + $0x2a8] sm:$0xff]
    %v189 = vld [vmem:[#allocation5 + $0x2b0] sm:$0xff]
    %v190 = vld [vmem:[#allocation5 + $0x2b8] sm:$0xff]
    %v191 = vld [vmem:[#allocation5 + $0x2c0] sm:$0xff]
    %v192 = vld [vmem:[#allocation5 + $0x2c8] sm:$0xff]
    %v193 = vld [vmem:[#allocation5 + $0x2d0] sm:$0xff]
    %v194 = vld [vmem:[#allocation5 + $0x2d8] sm:$0xff]
    %v195 = vld [vmem:[#allocation5 + $0x2e0] sm:$0xff]
    %v196 = vld [vmem:[#allocation5 + $0x2e8] sm:$0xff]
    %v197 = vld [vmem:[#allocation5 + $0x2f0] sm:$0xff]
    %v198 = vld [vmem:[#allocation5 + $0x2f8] sm:$0xff]
    %v199 = vld [vmem:[#allocation5 + $0x300] sm:$0xff]
    %v200 = vld [vmem:[#allocation5 + $0x308] sm:$0xff]
    %v201 = vld [vmem:[#allocation5 + $0x310] sm:$0xff]
    %v202 = vld [vmem:[#allocation5 + $0x318] sm:$0xff]
    %v203 = vld [vmem:[#allocation5 + $0x320] sm:$0xff]
    %v204 = vld [vmem:[#allocation5 + $0x328] sm:$0xff]
    %v205 = vld [vmem:[#allocation5 + $0x330] sm:$0xff]
    %v206 = vld [vmem:[#allocation5 + $0x338] sm:$0xff]
    %v207 = vld [vmem:[#allocation5 + $0x340] sm:$0xff]
    %v208 = vld [vmem:[#allocation5 + $0x348] sm:$0xff]
    %v209 = vld [vmem:[#allocation5 + $0x350] sm:$0xff]
    %v210 = vld [vmem:[#allocation5 + $0x358] sm:$0xff]
    %v211 = vld [vmem:[#allocation5 + $0x360] sm:$0xff]
    %v212 = vld [vmem:[#allocation5 + $0x368] sm:$0xff]
    %v213 = vld [vmem:[#allocation5 + $0x370] sm:$0xff]
    %v214 = vld [vmem:[#allocation5 + $0x378] sm:$0xff]
    %v215 = vld [vmem:[#allocation5 + $0x380] sm:$0xff]
    %v216 = vld [vmem:[#allocation5 + $0x388] sm:$0xff]
    %v217 = vld [vmem:[#allocation5 + $0x390] sm:$0xff]
    %v218 = vld [vmem:[#allocation5 + $0x398] sm:$0xff]
    %v219 = vld [vmem:[#allocation5 + $0x3a0] sm:$0xff]
    %v220 = vld [vmem:[#allocation5 + $0x3a8] sm:$0xff]
    %v221 = vld [vmem:[#allocation5 + $0x3b0] sm:$0xff]
    %v222 = vld [vmem:[#allocation5 + $0x3b8] sm:$0xff]
    %v223 = vld [vmem:[#allocation5 + $0x3c0] sm:$0xff]
    %v224 = vld [vmem:[#allocation5 + $0x3c8] sm:$0xff]
    %v225 = vld [vmem:[#allocation5 + $0x3d0] sm:$0xff]
    %v226 = vld [vmem:[#allocation5 + $0x3d8] sm:$0xff]
    %v227 = vld [vmem:[#allocation5 + $0x3e0] sm:$0xff]
    %v228 = vld [vmem:[#allocation5 + $0x3e8] sm:$0xff]
    %v229 = vld [vmem:[#allocation5 + $0x3f0] sm:$0xff]
    %v230 = vld [vmem:[#allocation5 + $0x3f8] sm:$0xff]
    %v231 = vld [vmem:[#allocation7] sm:$0xf]
    %v233 = vperm.slane %v231, 0
    %v234 = vperm.slane %v231, 1
    %v235 = vperm.slane %v231, 2
    %v236 = vperm.slane %v231, 3
    %241 = vmatpush.msra.mxu0 %v163
    %242 = vmatpush.msra.mxu0 %v159
    %243 = vmatpush.msra.mxu0 %v155
    %244 = vmatpush.msra.mxu0 %v151
    %245 = vmatpush.msra.mxu0 %v147
    %246 = vmatpush.msra.mxu0 %v143
    %247 = vmatpush.msra.mxu0 %v139
    %248 = vmatpush.msra.mxu0 %v135
    %249 = vmatpush.msra.mxu0 %v131
    %250 = vmatpush.msra.mxu0 %v127
    %251 = vmatpush.msra.mxu0 %v123
    %252 = vmatpush.msra.mxu0 %v119
    %253 = vmatpush.msra.mxu0 %v115
    %254 = vmatpush.msra.mxu0 %v111
    %255 = vmatpush.msra.mxu0 %v107
    %256 = vmatpush.msra.mxu0 %v103
    %257 = vmatmul.f32.gmra.mxu0 %v95
    %v258 = vpop.f32.mrf.mxu0
    %v259 = vadd.f32 %v233, %v258
    %260 = vmatmul.f32.gmra.mxu0 %v99
    %v261 = vpop.f32.mrf.mxu0
    %v262 = vadd.f32 %v233, %v261
    %263 = vdwg.mxu0
    %264 = vmatpush.msra.mxu0 %v227
    %265 = vmatpush.msra.mxu0 %v223
    %266 = vmatpush.msra.mxu0 %v219
    %267 = vmatpush.msra.mxu0 %v215
    %268 = vmatpush.msra.mxu0 %v211
    %269 = vmatpush.msra.mxu0 %v207
    %270 = vmatpush.msra.mxu0 %v203
    %271 = vmatpush.msra.mxu0 %v199
    %272 = vmatpush.msra.mxu0 %v195
    %273 = vmatpush.msra.mxu0 %v191
    %274 = vmatpush.msra.mxu0 %v187
    %275 = vmatpush.msra.mxu0 %v183
    %276 = vmatpush.msra.mxu0 %v179
    %277 = vmatpush.msra.mxu0 %v175
    %278 = vmatpush.msra.mxu0 %v171
    %279 = vmatpush.msra.mxu0 %v167
    %280 = vmatmul.f32.gmra.mxu0 %v96
    %v281 = vpop.f32.mrf.mxu0
    %v282 = vadd.f32 %v259, %v281
    %283 = vmatmul.f32.gmra.mxu0 %v100
    %v284 = vpop.f32.mrf.mxu0
    %v285 = vadd.f32 %v262, %v284
    %286 = vdwg.mxu0
    %287 = vmatpush.msra.mxu0 %v164
    %288 = vmatpush.msra.mxu0 %v160
    %289 = vmatpush.msra.mxu0 %v156
    %290 = vmatpush.msra.mxu0 %v152
    %291 = vmatpush.msra.mxu0 %v148
    %292 = vmatpush.msra.mxu0 %v144
    %293 = vmatpush.msra.mxu0 %v140
    %294 = vmatpush.msra.mxu0 %v136
    %295 = vmatpush.msra.mxu0 %v132
    %296 = vmatpush.msra.mxu0 %v128
    %297 = vmatpush.msra.mxu0 %v124
    %298 = vmatpush.msra.mxu0 %v120
    %299 = vmatpush.msra.mxu0 %v116
    %300 = vmatpush.msra.mxu0 %v112
    %301 = vmatpush.msra.mxu0 %v108
    %302 = vmatpush.msra.mxu0 %v104
    %303 = vmatmul.f32.gmra.mxu0 %v95
    %v304 = vpop.f32.mrf.mxu0
    %v305 = vadd.f32 %v234, %v304
    %306 = vmatmul.f32.gmra.mxu0 %v99
    %v307 = vpop.f32.mrf.mxu0
    %v308 = vadd.f32 %v234, %v307
    %309 = vdwg.mxu0
    %310 = vmatpush.msra.mxu0 %v228
    %311 = vmatpush.msra.mxu0 %v224
    %312 = vmatpush.msra.mxu0 %v220
    %313 = vmatpush.msra.mxu0 %v216
    %314 = vmatpush.msra.mxu0 %v212
    %315 = vmatpush.msra.mxu0 %v208
    %316 = vmatpush.msra.mxu0 %v204
    %317 = vmatpush.msra.mxu0 %v200
    %318 = vmatpush.msra.mxu0 %v196
    %319 = vmatpush.msra.mxu0 %v192
    %320 = vmatpush.msra.mxu0 %v188
    %321 = vmatpush.msra.mxu0 %v184
    %322 = vmatpush.msra.mxu0 %v180
    %323 = vmatpush.msra.mxu0 %v176
    %324 = vmatpush.msra.mxu0 %v172
    %325 = vmatpush.msra.mxu0 %v168
    %326 = vmatmul.f32.gmra.mxu0 %v96
    %v327 = vpop.f32.mrf.mxu0
    %v328 = vadd.f32 %v305, %v327
    %329 = vmatmul.f32.gmra.mxu0 %v100
    %v330 = vpop.f32.mrf.mxu0
    %v331 = vadd.f32 %v308, %v330
    %332 = vdwg.mxu0
    %333 = vmatpush.msra.mxu0 %v165
    %334 = vmatpush.msra.mxu0 %v161
    %335 = vmatpush.msra.mxu0 %v157
    %336 = vmatpush.msra.mxu0 %v153
    %337 = vmatpush.msra.mxu0 %v149
    %338 = vmatpush.msra.mxu0 %v145
    %339 = vmatpush.msra.mxu0 %v141
    %340 = vmatpush.msra.mxu0 %v137
    %341 = vmatpush.msra.mxu0 %v133
    %342 = vmatpush.msra.mxu0 %v129
    %343 = vmatpush.msra.mxu0 %v125
    %344 = vmatpush.msra.mxu0 %v121
    %345 = vmatpush.msra.mxu0 %v117
    %346 = vmatpush.msra.mxu0 %v113
    %347 = vmatpush.msra.mxu0 %v109
    %348 = vmatpush.msra.mxu0 %v105
    %349 = vmatmul.f32.gmra.mxu0 %v95
    %v350 = vpop.f32.mrf.mxu0
    %v351 = vadd.f32 %v235, %v350
    %352 = vmatmul.f32.gmra.mxu0 %v99
    %v353 = vpop.f32.mrf.mxu0
    %v354 = vadd.f32 %v235, %v353
    %355 = vdwg.mxu0
    %356 = vmatpush.msra.mxu0 %v229
    %357 = vmatpush.msra.mxu0 %v225
    %358 = vmatpush.msra.mxu0 %v221
    %359 = vmatpush.msra.mxu0 %v217
    %360 = vmatpush.msra.mxu0 %v213
    %361 = vmatpush.msra.mxu0 %v209
    %362 = vmatpush.msra.mxu0 %v205
    %363 = vmatpush.msra.mxu0 %v201
    %364 = vmatpush.msra.mxu0 %v197
    %365 = vmatpush.msra.mxu0 %v193
    %366 = vmatpush.msra.mxu0 %v189
    %367 = vmatpush.msra.mxu0 %v185
    %368 = vmatpush.msra.mxu0 %v181
    %369 = vmatpush.msra.mxu0 %v177
    %370 = vmatpush.msra.mxu0 %v173
    %371 = vmatpush.msra.mxu0 %v169
    %372 = vmatmul.f32.gmra.mxu0 %v96
    %v373 = vpop.f32.mrf.mxu0
    %v374 = vadd.f32 %v351, %v373
    %375 = vmatmul.f32.gmra.mxu0 %v100
    %v376 = vpop.f32.mrf.mxu0
    %v377 = vadd.f32 %v354, %v376
    %378 = vdwg.mxu0
    %379 = vmatpush.msra.mxu0 %v166
    %380 = vmatpush.msra.mxu0 %v162
    %381 = vmatpush.msra.mxu0 %v158
    %382 = vmatpush.msra.mxu0 %v154
    %383 = vmatpush.msra.mxu0 %v150
    %384 = vmatpush.msra.mxu0 %v146
    %385 = vmatpush.msra.mxu0 %v142
    %386 = vmatpush.msra.mxu0 %v138
    %387 = vmatpush.msra.mxu0 %v134
    %388 = vmatpush.msra.mxu0 %v130
    %389 = vmatpush.msra.mxu0 %v126
    %390 = vmatpush.msra.mxu0 %v122
    %391 = vmatpush.msra.mxu0 %v118
    %392 = vmatpush.msra.mxu0 %v114
    %393 = vmatpush.msra.mxu0 %v110
    %394 = vmatpush.msra.mxu0 %v106
    %395 = vmatmul.f32.gmra.mxu0 %v95
    %v396 = vpop.f32.mrf.mxu0
    %v397 = vadd.f32 %v236, %v396
    %398 = vmatmul.f32.gmra.mxu0 %v99
    %v399 = vpop.f32.mrf.mxu0
    %v400 = vadd.f32 %v236, %v399
    %401 = vdwg.mxu0
    %402 = vmatpush.msra.mxu0 %v230
    %403 = vmatpush.msra.mxu0 %v226
    %404 = vmatpush.msra.mxu0 %v222
    %405 = vmatpush.msra.mxu0 %v218
    %406 = vmatpush.msra.mxu0 %v214
    %407 = vmatpush.msra.mxu0 %v210
    %408 = vmatpush.msra.mxu0 %v206
    %409 = vmatpush.msra.mxu0 %v202
    %410 = vmatpush.msra.mxu0 %v198
    %411 = vmatpush.msra.mxu0 %v194
    %412 = vmatpush.msra.mxu0 %v190
    %413 = vmatpush.msra.mxu0 %v186
    %414 = vmatpush.msra.mxu0 %v182
    %415 = vmatpush.msra.mxu0 %v178
    %416 = vmatpush.msra.mxu0 %v174
    %417 = vmatpush.msra.mxu0 %v170
    %418 = vmatmul.f32.gmra.mxu0 %v96
    %v419 = vpop.f32.mrf.mxu0
    %v420 = vadd.f32 %v397, %v419
    %421 = vmatmul.f32.gmra.mxu0 %v100
    %v422 = vpop.f32.mrf.mxu0
    %v423 = vadd.f32 %v400, %v422
    %424 = vdwg.mxu0
    %v425 = vxor.u32 %v282, 2147483648
    %v426 = vxor.u32 %v285, 2147483648
    %v427 = vmul.f32 %v425, 1.442695
    %v428 = vpow.pop %v427
    %v429 = vmul.f32 %v426, 1.442695
    %v430 = vpow.pop %v429
    %v431 = vadd.f32 %v428, 1.0
    %v432 = vadd.f32 %v430, 1.0
    %v433 = vrcp.pop %v431
    %v434 = vmul.f32 %v431, %v433
    %v435 = vsub.f32 1.0, %v434
    %v436 = vmul.f32 %v433, %v435
    %v437 = vadd.f32 %v433, %v436
    %vm438 = vweird.f32 %v431
    %vm439 = vweird.f32 %v433
    %vm440 = vmor %vm438, %vm439
    %v441 = vsel %vm440, %v433, %v437
    %v442 = vand.u32 2147483647, %v431
    %vm443 = vcmp.eq.f32.partialorder %v442, 8.507059e+37
    %v444 = vand.u32 %v431, 2147483648
    %v445 = vor.u32 1.1754944e-38, %v444
    %v446 = vsel %vm443, %v445, %v441
    %v447 = vmul.f32 1.0, %v446
    %v448 = vrcp.pop %v432
    %v449 = vmul.f32 %v432, %v448
    %v450 = vsub.f32 1.0, %v449
    %v451 = vmul.f32 %v448, %v450
    %v452 = vadd.f32 %v448, %v451
    %vm453 = vweird.f32 %v432
    %vm454 = vweird.f32 %v448
    %vm455 = vmor %vm453, %vm454
    %v456 = vsel %vm455, %v448, %v452
    %v457 = vand.u32 2147483647, %v432
    %vm458 = vcmp.eq.f32.partialorder %v457, 8.507059e+37
    %v459 = vand.u32 %v432, 2147483648
    %v460 = vor.u32 1.1754944e-38, %v459
    %v461 = vsel %vm458, %v460, %v456
    %v462 = vmul.f32 1.0, %v461
    %v463 = vxor.u32 %v328, 2147483648
    %v464 = vxor.u32 %v331, 2147483648
    %v465 = vmul.f32 %v463, 1.442695
    %v466 = vpow.pop %v465
    %v467 = vmul.f32 %v464, 1.442695
    %v468 = vpow.pop %v467
    %v469 = vadd.f32 %v466, 1.0
    %v470 = vadd.f32 %v468, 1.0
    %v471 = vrcp.pop %v469
    %v472 = vmul.f32 %v469, %v471
    %v473 = vsub.f32 1.0, %v472
    %v474 = vmul.f32 %v471, %v473
    %v475 = vadd.f32 %v471, %v474
    %vm476 = vweird.f32 %v469
    %vm477 = vweird.f32 %v471
    %vm478 = vmor %vm476, %vm477
    %v479 = vsel %vm478, %v471, %v475
    %v480 = vand.u32 2147483647, %v469
    %vm481 = vcmp.eq.f32.partialorder %v480, 8.507059e+37
    %v482 = vand.u32 %v469, 2147483648
    %v483 = vor.u32 1.1754944e-38, %v482
    %v484 = vsel %vm481, %v483, %v479
    %v485 = vmul.f32 1.0, %v484
    %v486 = vrcp.pop %v470
    %v487 = vmul.f32 %v470, %v486
    %v488 = vsub.f32 1.0, %v487
    %v489 = vmul.f32 %v486, %v488
    %v490 = vadd.f32 %v486, %v489
    %vm491 = vweird.f32 %v470
    %vm492 = vweird.f32 %v486
    %vm493 = vmor %vm491, %vm492
    %v494 = vsel %vm493, %v486, %v490
    %v495 = vand.u32 2147483647, %v470
    %vm496 = vcmp.eq.f32.partialorder %v495, 8.507059e+37
    %v497 = vand.u32 %v470, 2147483648
    %v498 = vor.u32 1.1754944e-38, %v497
    %v499 = vsel %vm496, %v498, %v494
    %v500 = vmul.f32 1.0, %v499
    %v501 = vtanh.pop %v374
    %v502 = vtanh.pop %v377
    %v503 = vxor.u32 %v420, 2147483648
    %v504 = vxor.u32 %v423, 2147483648
    %v505 = vmul.f32 %v503, 1.442695
    %v506 = vpow.pop %v505
    %v507 = vmul.f32 %v504, 1.442695
    %v508 = vpow.pop %v507
    %v509 = vadd.f32 %v506, 1.0
    %v510 = vadd.f32 %v508, 1.0
    %v511 = vrcp.pop %v509
    %v512 = vmul.f32 %v509, %v511
    %v513 = vsub.f32 1.0, %v512
    %v514 = vmul.f32 %v511, %v513
    %v515 = vadd.f32 %v511, %v514
    %vm516 = vweird.f32 %v509
    %vm517 = vweird.f32 %v511
    %vm518 = vmor %vm516, %vm517
    %v519 = vsel %vm518, %v511, %v515
    %v520 = vand.u32 2147483647, %v509
    %vm521 = vcmp.eq.f32.partialorder %v520, 8.507059e+37
    %v522 = vand.u32 %v509, 2147483648
    %v523 = vor.u32 1.1754944e-38, %v522
    %v524 = vsel %vm521, %v523, %v519
    %v525 = vmul.f32 1.0, %v524
    %v526 = vrcp.pop %v510
    %v527 = vmul.f32 %v510, %v526
    %v528 = vsub.f32 1.0, %v527
    %v529 = vmul.f32 %v526, %v528
    %v530 = vadd.f32 %v526, %v529
    %vm531 = vweird.f32 %v510
    %vm532 = vweird.f32 %v526
    %vm533 = vmor %vm531, %vm532
    %v534 = vsel %vm533, %v526, %v530
    %v535 = vand.u32 2147483647, %v510
    %vm536 = vcmp.eq.f32.partialorder %v535, 8.507059e+37
    %v537 = vand.u32 %v510, 2147483648
    %v538 = vor.u32 1.1754944e-38, %v537
    %v539 = vsel %vm536, %v538, %v534
    %v540 = vmul.f32 1.0, %v539
    %v541 = vmul.f32 %v485, %v97
    %v542 = vmul.f32 %v500, %v101
    %v543 = vmul.f32 %v447, %v501
    %v544 = vmul.f32 %v462, %v502
    %v545 = vld [vmem:[#allocation8] sm:$0xff]
    %v546 = vld [vmem:[#allocation8 + $0x8] sm:$0xff]
    %v547 = vld [vmem:[#allocation8 + $0x10] sm:$0xff]
    %v548 = vld [vmem:[#allocation8 + $0x18] sm:$0xff]
    %v549 = vld [vmem:[#allocation8 + $0x20] sm:$0xff]
    %v550 = vld [vmem:[#allocation8 + $0x28] sm:$0xff]
    %v551 = vld [vmem:[#allocation8 + $0x30] sm:$0xff]
    %v552 = vld [vmem:[#allocation8 + $0x38] sm:$0xff]
    %v553 = vld [vmem:[#allocation8 + $0x40] sm:$0xff]
    %v554 = vld [vmem:[#allocation8 + $0x48] sm:$0xff]
    %v555 = vld [vmem:[#allocation8 + $0x50] sm:$0xff]
    %v556 = vld [vmem:[#allocation8 + $0x58] sm:$0xff]
    %v557 = vld [vmem:[#allocation8 + $0x60] sm:$0xff]
    %v558 = vld [vmem:[#allocation8 + $0x68] sm:$0xff]
    %v559 = vld [vmem:[#allocation8 + $0x70] sm:$0xff]
    %v560 = vld [vmem:[#allocation8 + $0x78] sm:$0xff]
    %v561 = vld [vmem:[#allocation8 + $0x80] sm:$0xff]
    %v562 = vld [vmem:[#allocation8 + $0x88] sm:$0xff]
    %v563 = vld [vmem:[#allocation8 + $0x90] sm:$0xff]
    %v564 = vld [vmem:[#allocation8 + $0x98] sm:$0xff]
    %v565 = vld [vmem:[#allocation8 + $0xa0] sm:$0xff]
    %v566 = vld [vmem:[#allocation8 + $0xa8] sm:$0xff]
    %v567 = vld [vmem:[#allocation8 + $0xb0] sm:$0xff]
    %v568 = vld [vmem:[#allocation8 + $0xb8] sm:$0xff]
    %v569 = vld [vmem:[#allocation8 + $0xc0] sm:$0xff]
    %v570 = vld [vmem:[#allocation8 + $0xc8] sm:$0xff]
    %v571 = vld [vmem:[#allocation8 + $0xd0] sm:$0xff]
    %v572 = vld [vmem:[#allocation8 + $0xd8] sm:$0xff]
    %v573 = vld [vmem:[#allocation8 + $0xe0] sm:$0xff]
    %v574 = vld [vmem:[#allocation8 + $0xe8] sm:$0xff]
    %v575 = vld [vmem:[#allocation8 + $0xf0] sm:$0xff]
    %v576 = vld [vmem:[#allocation8 + $0xf8] sm:$0xff]
    %v577 = vld [vmem:[#allocation8 + $0x100] sm:$0xff]
    %v578 = vld [vmem:[#allocation8 + $0x108] sm:$0xff]
    %v579 = vld [vmem:[#allocation8 + $0x110] sm:$0xff]
    %v580 = vld [vmem:[#allocation8 + $0x118] sm:$0xff]
    %v581 = vld [vmem:[#allocation8 + $0x120] sm:$0xff]
    %v582 = vld [vmem:[#allocation8 + $0x128] sm:$0xff]
    %v583 = vld [vmem:[#allocation8 + $0x130] sm:$0xff]
    %v584 = vld [vmem:[#allocation8 + $0x138] sm:$0xff]
    %v585 = vld [vmem:[#allocation8 + $0x140] sm:$0xff]
    %v586 = vld [vmem:[#allocation8 + $0x148] sm:$0xff]
    %v587 = vld [vmem:[#allocation8 + $0x150] sm:$0xff]
    %v588 = vld [vmem:[#allocation8 + $0x158] sm:$0xff]
    %v589 = vld [vmem:[#allocation8 + $0x160] sm:$0xff]
    %v590 = vld [vmem:[#allocation8 + $0x168] sm:$0xff]
    %v591 = vld [vmem:[#allocation8 + $0x170] sm:$0xff]
    %v592 = vld [vmem:[#allocation8 + $0x178] sm:$0xff]
    %v593 = vld [vmem:[#allocation8 + $0x180] sm:$0xff]
    %v594 = vld [vmem:[#allocation8 + $0x188] sm:$0xff]
    %v595 = vld [vmem:[#allocation8 + $0x190] sm:$0xff]
    %v596 = vld [vmem:[#allocation8 + $0x198] sm:$0xff]
    %v597 = vld [vmem:[#allocation8 + $0x1a0] sm:$0xff]
    %v598 = vld [vmem:[#allocation8 + $0x1a8] sm:$0xff]
    %v599 = vld [vmem:[#allocation8 + $0x1b0] sm:$0xff]
    %v600 = vld [vmem:[#allocation8 + $0x1b8] sm:$0xff]
    %v601 = vld [vmem:[#allocation8 + $0x1c0] sm:$0xff]
    %v602 = vld [vmem:[#allocation8 + $0x1c8] sm:$0xff]
    %v603 = vld [vmem:[#allocation8 + $0x1d0] sm:$0xff]
    %v604 = vld [vmem:[#allocation8 + $0x1d8] sm:$0xff]
    %v605 = vld [vmem:[#allocation8 + $0x1e0] sm:$0xff]
    %v606 = vld [vmem:[#allocation8 + $0x1e8] sm:$0xff]
    %v607 = vld [vmem:[#allocation8 + $0x1f0] sm:$0xff]
    %v608 = vld [vmem:[#allocation8 + $0x1f8] sm:$0xff]
    %v609 = vld [vmem:[#allocation8 + $0x200] sm:$0xff]
    %v610 = vld [vmem:[#allocation8 + $0x208] sm:$0xff]
    %v611 = vld [vmem:[#allocation8 + $0x210] sm:$0xff]
    %v612 = vld [vmem:[#allocation8 + $0x218] sm:$0xff]
    %v613 = vld [vmem:[#allocation8 + $0x220] sm:$0xff]
    %v614 = vld [vmem:[#allocation8 + $0x228] sm:$0xff]
    %v615 = vld [vmem:[#allocation8 + $0x230] sm:$0xff]
    %v616 = vld [vmem:[#allocation8 + $0x238] sm:$0xff]
    %v617 = vld [vmem:[#allocation8 + $0x240] sm:$0xff]
    %v618 = vld [vmem:[#allocation8 + $0x248] sm:$0xff]
    %v619 = vld [vmem:[#allocation8 + $0x250] sm:$0xff]
    %v620 = vld [vmem:[#allocation8 + $0x258] sm:$0xff]
    %v621 = vld [vmem:[#allocation8 + $0x260] sm:$0xff]
    %v622 = vld [vmem:[#allocation8 + $0x268] sm:$0xff]
    %v623 = vld [vmem:[#allocation8 + $0x270] sm:$0xff]
    %v624 = vld [vmem:[#allocation8 + $0x278] sm:$0xff]
    %v625 = vld [vmem:[#allocation8 + $0x280] sm:$0xff]
    %v626 = vld [vmem:[#allocation8 + $0x288] sm:$0xff]
    %v627 = vld [vmem:[#allocation8 + $0x290] sm:$0xff]
    %v628 = vld [vmem:[#allocation8 + $0x298] sm:$0xff]
    %v629 = vld [vmem:[#allocation8 + $0x2a0] sm:$0xff]
    %v630 = vld [vmem:[#allocation8 + $0x2a8] sm:$0xff]
    %v631 = vld [vmem:[#allocation8 + $0x2b0] sm:$0xff]
    %v632 = vld [vmem:[#allocation8 + $0x2b8] sm:$0xff]
    %v633 = vld [vmem:[#allocation8 + $0x2c0] sm:$0xff]
    %v634 = vld [vmem:[#allocation8 + $0x2c8] sm:$0xff]
    %v635 = vld [vmem:[#allocation8 + $0x2d0] sm:$0xff]
    %v636 = vld [vmem:[#allocation8 + $0x2d8] sm:$0xff]
    %v637 = vld [vmem:[#allocation8 + $0x2e0] sm:$0xff]
    %v638 = vld [vmem:[#allocation8 + $0x2e8] sm:$0xff]
    %v639 = vld [vmem:[#allocation8 + $0x2f0] sm:$0xff]
    %v640 = vld [vmem:[#allocation8 + $0x2f8] sm:$0xff]
    %v641 = vld [vmem:[#allocation8 + $0x300] sm:$0xff]
    %v642 = vld [vmem:[#allocation8 + $0x308] sm:$0xff]
    %v643 = vld [vmem:[#allocation8 + $0x310] sm:$0xff]
    %v644 = vld [vmem:[#allocation8 + $0x318] sm:$0xff]
    %v645 = vld [vmem:[#allocation8 + $0x320] sm:$0xff]
    %v646 = vld [vmem:[#allocation8 + $0x328] sm:$0xff]
    %v647 = vld [vmem:[#allocation8 + $0x330] sm:$0xff]
    %v648 = vld [vmem:[#allocation8 + $0x338] sm:$0xff]
    %v649 = vld [vmem:[#allocation8 + $0x340] sm:$0xff]
    %v650 = vld [vmem:[#allocation8 + $0x348] sm:$0xff]
    %v651 = vld [vmem:[#allocation8 + $0x350] sm:$0xff]
    %v652 = vld [vmem:[#allocation8 + $0x358] sm:$0xff]
    %v653 = vld [vmem:[#allocation8 + $0x360] sm:$0xff]
    %v654 = vld [vmem:[#allocation8 + $0x368] sm:$0xff]
    %v655 = vld [vmem:[#allocation8 + $0x370] sm:$0xff]
    %v656 = vld [vmem:[#allocation8 + $0x378] sm:$0xff]
    %v657 = vld [vmem:[#allocation8 + $0x380] sm:$0xff]
    %v658 = vld [vmem:[#allocation8 + $0x388] sm:$0xff]
    %v659 = vld [vmem:[#allocation8 + $0x390] sm:$0xff]
    %v660 = vld [vmem:[#allocation8 + $0x398] sm:$0xff]
    %v661 = vld [vmem:[#allocation8 + $0x3a0] sm:$0xff]
    %v662 = vld [vmem:[#allocation8 + $0x3a8] sm:$0xff]
    %v663 = vld [vmem:[#allocation8 + $0x3b0] sm:$0xff]
    %v664 = vld [vmem:[#allocation8 + $0x3b8] sm:$0xff]
    %v665 = vld [vmem:[#allocation8 + $0x3c0] sm:$0xff]
    %v666 = vld [vmem:[#allocation8 + $0x3c8] sm:$0xff]
    %v667 = vld [vmem:[#allocation8 + $0x3d0] sm:$0xff]
    %v668 = vld [vmem:[#allocation8 + $0x3d8] sm:$0xff]
    %v669 = vld [vmem:[#allocation8 + $0x3e0] sm:$0xff]
    %v670 = vld [vmem:[#allocation8 + $0x3e8] sm:$0xff]
    %v671 = vld [vmem:[#allocation8 + $0x3f0] sm:$0xff]
    %v672 = vld [vmem:[#allocation8 + $0x3f8] sm:$0xff]
    %v673 = vld [vmem:[#allocation10] sm:$0xf]
    %v675 = vperm.slane %v673, 0
    %v676 = vperm.slane %v673, 1
    %v677 = vperm.slane %v673, 2
    %v678 = vperm.slane %v673, 3
    %683 = vmatpush.msra.mxu0 %v605
    %684 = vmatpush.msra.mxu0 %v601
    %685 = vmatpush.msra.mxu0 %v597
    %686 = vmatpush.msra.mxu0 %v593
    %687 = vmatpush.msra.mxu0 %v589
    %688 = vmatpush.msra.mxu0 %v585
    %689 = vmatpush.msra.mxu0 %v581
    %690 = vmatpush.msra.mxu0 %v577
    %691 = vmatpush.msra.mxu0 %v573
    %692 = vmatpush.msra.mxu0 %v569
    %693 = vmatpush.msra.mxu0 %v565
    %694 = vmatpush.msra.mxu0 %v561
    %695 = vmatpush.msra.mxu0 %v557
    %696 = vmatpush.msra.mxu0 %v553
    %697 = vmatpush.msra.mxu0 %v549
    %698 = vmatpush.msra.mxu0 %v545
    %699 = vmatmul.f32.gmra.mxu0 %v543
    %v700 = vpop.f32.mrf.mxu0
    %v701 = vadd.f32 %v675, %v700
    %702 = vmatmul.f32.gmra.mxu0 %v544
    %v703 = vpop.f32.mrf.mxu0
    %v704 = vadd.f32 %v675, %v703
    %705 = vdwg.mxu0
    %706 = vmatpush.msra.mxu0 %v669
    %707 = vmatpush.msra.mxu0 %v665
    %708 = vmatpush.msra.mxu0 %v661
    %709 = vmatpush.msra.mxu0 %v657
    %710 = vmatpush.msra.mxu0 %v653
    %711 = vmatpush.msra.mxu0 %v649
    %712 = vmatpush.msra.mxu0 %v645
    %713 = vmatpush.msra.mxu0 %v641
    %714 = vmatpush.msra.mxu0 %v637
    %715 = vmatpush.msra.mxu0 %v633
    %716 = vmatpush.msra.mxu0 %v629
    %717 = vmatpush.msra.mxu0 %v625
    %718 = vmatpush.msra.mxu0 %v621
    %719 = vmatpush.msra.mxu0 %v617
    %720 = vmatpush.msra.mxu0 %v613
    %721 = vmatpush.msra.mxu0 %v609
    %722 = vmatmul.f32.gmra.mxu0 %v541
    %v723 = vpop.f32.mrf.mxu0
    %v724 = vadd.f32 %v701, %v723
    %725 = vmatmul.f32.gmra.mxu0 %v542
    %v726 = vpop.f32.mrf.mxu0
    %v727 = vadd.f32 %v704, %v726
    %728 = vdwg.mxu0
    %729 = vmatpush.msra.mxu0 %v606
    %730 = vmatpush.msra.mxu0 %v602
    %731 = vmatpush.msra.mxu0 %v598
    %732 = vmatpush.msra.mxu0 %v594
    %733 = vmatpush.msra.mxu0 %v590
    %734 = vmatpush.msra.mxu0 %v586
    %735 = vmatpush.msra.mxu0 %v582
    %736 = vmatpush.msra.mxu0 %v578
    %737 = vmatpush.msra.mxu0 %v574
    %738 = vmatpush.msra.mxu0 %v570
    %739 = vmatpush.msra.mxu0 %v566
    %740 = vmatpush.msra.mxu0 %v562
    %741 = vmatpush.msra.mxu0 %v558
    %742 = vmatpush.msra.mxu0 %v554
    %743 = vmatpush.msra.mxu0 %v550
    %744 = vmatpush.msra.mxu0 %v546
    %745 = vmatmul.f32.gmra.mxu0 %v543
    %v746 = vpop.f32.mrf.mxu0
    %v747 = vadd.f32 %v676, %v746
    %748 = vmatmul.f32.gmra.mxu0 %v544
    %v749 = vpop.f32.mrf.mxu0
    %v750 = vadd.f32 %v676, %v749
    %751 = vdwg.mxu0
    %752 = vmatpush.msra.mxu0 %v670
    %753 = vmatpush.msra.mxu0 %v666
    %754 = vmatpush.msra.mxu0 %v662
    %755 = vmatpush.msra.mxu0 %v658
    %756 = vmatpush.msra.mxu0 %v654
    %757 = vmatpush.msra.mxu0 %v650
    %758 = vmatpush.msra.mxu0 %v646
    %759 = vmatpush.msra.mxu0 %v642
    %760 = vmatpush.msra.mxu0 %v638
    %761 = vmatpush.msra.mxu0 %v634
    %762 = vmatpush.msra.mxu0 %v630
    %763 = vmatpush.msra.mxu0 %v626
    %764 = vmatpush.msra.mxu0 %v622
    %765 = vmatpush.msra.mxu0 %v618
    %766 = vmatpush.msra.mxu0 %v614
    %767 = vmatpush.msra.mxu0 %v610
    %768 = vmatmul.f32.gmra.mxu0 %v541
    %v769 = vpop.f32.mrf.mxu0
    %v770 = vadd.f32 %v747, %v769
    %771 = vmatmul.f32.gmra.mxu0 %v542
    %v772 = vpop.f32.mrf.mxu0
    %v773 = vadd.f32 %v750, %v772
    %774 = vdwg.mxu0
    %775 = vmatpush.msra.mxu0 %v607
    %776 = vmatpush.msra.mxu0 %v603
    %777 = vmatpush.msra.mxu0 %v599
    %778 = vmatpush.msra.mxu0 %v595
    %779 = vmatpush.msra.mxu0 %v591
    %780 = vmatpush.msra.mxu0 %v587
    %781 = vmatpush.msra.mxu0 %v583
    %782 = vmatpush.msra.mxu0 %v579
    %783 = vmatpush.msra.mxu0 %v575
    %784 = vmatpush.msra.mxu0 %v571
    %785 = vmatpush.msra.mxu0 %v567
    %786 = vmatpush.msra.mxu0 %v563
    %787 = vmatpush.msra.mxu0 %v559
    %788 = vmatpush.msra.mxu0 %v555
    %789 = vmatpush.msra.mxu0 %v551
    %790 = vmatpush.msra.mxu0 %v547
    %791 = vmatmul.f32.gmra.mxu0 %v543
    %v792 = vpop.f32.mrf.mxu0
    %v793 = vadd.f32 %v677, %v792
    %794 = vmatmul.f32.gmra.mxu0 %v544
    %v795 = vpop.f32.mrf.mxu0
    %v796 = vadd.f32 %v677, %v795
    %797 = vdwg.mxu0
    %798 = vmatpush.msra.mxu0 %v671
    %799 = vmatpush.msra.mxu0 %v667
    %800 = vmatpush.msra.mxu0 %v663
    %801 = vmatpush.msra.mxu0 %v659
    %802 = vmatpush.msra.mxu0 %v655
    %803 = vmatpush.msra.mxu0 %v651
    %804 = vmatpush.msra.mxu0 %v647
    %805 = vmatpush.msra.mxu0 %v643
    %806 = vmatpush.msra.mxu0 %v639
    %807 = vmatpush.msra.mxu0 %v635
    %808 = vmatpush.msra.mxu0 %v631
    %809 = vmatpush.msra.mxu0 %v627
    %810 = vmatpush.msra.mxu0 %v623
    %811 = vmatpush.msra.mxu0 %v619
    %812 = vmatpush.msra.mxu0 %v615
    %813 = vmatpush.msra.mxu0 %v611
    %814 = vmatmul.f32.gmra.mxu0 %v541
    %v815 = vpop.f32.mrf.mxu0
    %v816 = vadd.f32 %v793, %v815
    %817 = vmatmul.f32.gmra.mxu0 %v542
    %v818 = vpop.f32.mrf.mxu0
    %v819 = vadd.f32 %v796, %v818
    %820 = vdwg.mxu0
    %821 = vmatpush.msra.mxu0 %v608
    %822 = vmatpush.msra.mxu0 %v604
    %823 = vmatpush.msra.mxu0 %v600
    %824 = vmatpush.msra.mxu0 %v596
    %825 = vmatpush.msra.mxu0 %v592
    %826 = vmatpush.msra.mxu0 %v588
    %827 = vmatpush.msra.mxu0 %v584
    %828 = vmatpush.msra.mxu0 %v580
    %829 = vmatpush.msra.mxu0 %v576
    %830 = vmatpush.msra.mxu0 %v572
    %831 = vmatpush.msra.mxu0 %v568
    %832 = vmatpush.msra.mxu0 %v564
    %833 = vmatpush.msra.mxu0 %v560
    %834 = vmatpush.msra.mxu0 %v556
    %835 = vmatpush.msra.mxu0 %v552
    %836 = vmatpush.msra.mxu0 %v548
    %837 = vmatmul.f32.gmra.mxu0 %v543
    %v838 = vpop.f32.mrf.mxu0
    %v839 = vadd.f32 %v678, %v838
    %840 = vmatmul.f32.gmra.mxu0 %v544
    %v841 = vpop.f32.mrf.mxu0
    %v842 = vadd.f32 %v678, %v841
    %843 = vdwg.mxu0
    %844 = vmatpush.msra.mxu0 %v672
    %845 = vmatpush.msra.mxu0 %v668
    %846 = vmatpush.msra.mxu0 %v664
    %847 = vmatpush.msra.mxu0 %v660
    %848 = vmatpush.msra.mxu0 %v656
    %849 = vmatpush.msra.mxu0 %v652
    %850 = vmatpush.msra.mxu0 %v648
    %851 = vmatpush.msra.mxu0 %v644
    %852 = vmatpush.msra.mxu0 %v640
    %853 = vmatpush.msra.mxu0 %v636
    %854 = vmatpush.msra.mxu0 %v632
    %855 = vmatpush.msra.mxu0 %v628
    %856 = vmatpush.msra.mxu0 %v624
    %857 = vmatpush.msra.mxu0 %v620
    %858 = vmatpush.msra.mxu0 %v616
    %859 = vmatpush.msra.mxu0 %v612
    %860 = vmatmul.f32.gmra.mxu0 %v541
    %v861 = vpop.f32.mrf.mxu0
    %v862 = vadd.f32 %v839, %v861
    %863 = vmatmul.f32.gmra.mxu0 %v542
    %v864 = vpop.f32.mrf.mxu0
    %v865 = vadd.f32 %v842, %v864
    %866 = vdwg.mxu0
    %v867 = vxor.u32 %v724, 2147483648
    %v868 = vxor.u32 %v727, 2147483648
    %v869 = vmul.f32 %v867, 1.442695
    %v870 = vpow.pop %v869
    %v871 = vmul.f32 %v868, 1.442695
    %v872 = vpow.pop %v871
    %v873 = vadd.f32 %v870, 1.0
    %v874 = vadd.f32 %v872, 1.0
    %v875 = vrcp.pop %v873
    %v876 = vmul.f32 %v873, %v875
    %v877 = vsub.f32 1.0, %v876
    %v878 = vmul.f32 %v875, %v877
    %v879 = vadd.f32 %v875, %v878
    %vm880 = vweird.f32 %v873
    %vm881 = vweird.f32 %v875
    %vm882 = vmor %vm880, %vm881
    %v883 = vsel %vm882, %v875, %v879
    %v884 = vand.u32 2147483647, %v873
    %vm885 = vcmp.eq.f32.partialorder %v884, 8.507059e+37
    %v886 = vand.u32 %v873, 2147483648
    %v887 = vor.u32 1.1754944e-38, %v886
    %v888 = vsel %vm885, %v887, %v883
    %v889 = vmul.f32 1.0, %v888
    %v890 = vrcp.pop %v874
    %v891 = vmul.f32 %v874, %v890
    %v892 = vsub.f32 1.0, %v891
    %v893 = vmul.f32 %v890, %v892
    %v894 = vadd.f32 %v890, %v893
    %vm895 = vweird.f32 %v874
    %vm896 = vweird.f32 %v890
    %vm897 = vmor %vm895, %vm896
    %v898 = vsel %vm897, %v890, %v894
    %v899 = vand.u32 2147483647, %v874
    %vm900 = vcmp.eq.f32.partialorder %v899, 8.507059e+37
    %v901 = vand.u32 %v874, 2147483648
    %v902 = vor.u32 1.1754944e-38, %v901
    %v903 = vsel %vm900, %v902, %v898
    %v904 = vmul.f32 1.0, %v903
    %v905 = vxor.u32 %v770, 2147483648
    %v906 = vxor.u32 %v773, 2147483648
    %v907 = vmul.f32 %v905, 1.442695
    %v908 = vpow.pop %v907
    %v909 = vmul.f32 %v906, 1.442695
    %v910 = vpow.pop %v909
    %v911 = vadd.f32 %v908, 1.0
    %v912 = vadd.f32 %v910, 1.0
    %v913 = vrcp.pop %v911
    %v914 = vmul.f32 %v911, %v913
    %v915 = vsub.f32 1.0, %v914
    %v916 = vmul.f32 %v913, %v915
    %v917 = vadd.f32 %v913, %v916
    %vm918 = vweird.f32 %v911
    %vm919 = vweird.f32 %v913
    %vm920 = vmor %vm918, %vm919
    %v921 = vsel %vm920, %v913, %v917
    %v922 = vand.u32 2147483647, %v911
    %vm923 = vcmp.eq.f32.partialorder %v922, 8.507059e+37
    %v924 = vand.u32 %v911, 2147483648
    %v925 = vor.u32 1.1754944e-38, %v924
    %v926 = vsel %vm923, %v925, %v921
    %v927 = vmul.f32 1.0, %v926
    %v928 = vrcp.pop %v912
    %v929 = vmul.f32 %v912, %v928
    %v930 = vsub.f32 1.0, %v929
    %v931 = vmul.f32 %v928, %v930
    %v932 = vadd.f32 %v928, %v931
    %vm933 = vweird.f32 %v912
    %vm934 = vweird.f32 %v928
    %vm935 = vmor %vm933, %vm934
    %v936 = vsel %vm935, %v928, %v932
    %v937 = vand.u32 2147483647, %v912
    %vm938 = vcmp.eq.f32.partialorder %v937, 8.507059e+37
    %v939 = vand.u32 %v912, 2147483648
    %v940 = vor.u32 1.1754944e-38, %v939
    %v941 = vsel %vm938, %v940, %v936
    %v942 = vmul.f32 1.0, %v941
    %v943 = vtanh.pop %v816
    %v944 = vtanh.pop %v819
    %v945 = vxor.u32 %v862, 2147483648
    %v946 = vxor.u32 %v865, 2147483648
    %v947 = vmul.f32 %v945, 1.442695
    %v948 = vpow.pop %v947
    %v949 = vmul.f32 %v946, 1.442695
    %v950 = vpow.pop %v949
    %v951 = vadd.f32 %v948, 1.0
    %v952 = vadd.f32 %v950, 1.0
    %v953 = vrcp.pop %v951
    %v954 = vmul.f32 %v951, %v953
    %v955 = vsub.f32 1.0, %v954
    %v956 = vmul.f32 %v953, %v955
    %v957 = vadd.f32 %v953, %v956
    %vm958 = vweird.f32 %v951
    %vm959 = vweird.f32 %v953
    %vm960 = vmor %vm958, %vm959
    %v961 = vsel %vm960, %v953, %v957
    %v962 = vand.u32 2147483647, %v951
    %vm963 = vcmp.eq.f32.partialorder %v962, 8.507059e+37
    %v964 = vand.u32 %v951, 2147483648
    %v965 = vor.u32 1.1754944e-38, %v964
    %v966 = vsel %vm963, %v965, %v961
    %v967 = vmul.f32 1.0, %v966
    %v968 = vrcp.pop %v952
    %v969 = vmul.f32 %v952, %v968
    %v970 = vsub.f32 1.0, %v969
    %v971 = vmul.f32 %v968, %v970
    %v972 = vadd.f32 %v968, %v971
    %vm973 = vweird.f32 %v952
    %vm974 = vweird.f32 %v968
    %vm975 = vmor %vm973, %vm974
    %v976 = vsel %vm975, %v968, %v972
    %v977 = vand.u32 2147483647, %v952
    %vm978 = vcmp.eq.f32.partialorder %v977, 8.507059e+37
    %v979 = vand.u32 %v952, 2147483648
    %v980 = vor.u32 1.1754944e-38, %v979
    %v981 = vsel %vm978, %v980, %v976
    %v982 = vmul.f32 1.0, %v981
    %v983 = vmul.f32 %v927, %v98
    %v984 = vmul.f32 %v942, %v102
    %v985 = vmul.f32 %v889, %v943
    %v986 = vmul.f32 %v904, %v944
    %v987 = vadd.f32 %v983, %v985
    %v988 = vadd.f32 %v984, %v986
    %v989 = vtanh.pop %v987
    %v990 = vtanh.pop %v988
    %v991 = vmul.f32 %v967, %v989
    %v992 = vmul.f32 %v982, %v990
    %v993 = vtanh.pop %v991
    %v994 = vtanh.pop %v992
    %v995 = vmul.f32 %v525, %v993
    %v996 = vmul.f32 %v540, %v994
    %997 = vst [vmem:[#allocation11] sm:$0xff] %v995
    %998 = vst [vmem:[#allocation11 + $0x8] sm:$0xff] %v991
    %999 = vst [vmem:[#allocation11 + $0x10] sm:$0xff] %v987
    %1000 = vst [vmem:[#allocation11 + $0x18] sm:$0xff] %v996
    %1001 = vst [vmem:[#allocation11 + $0x20] sm:$0xff] %v992
    %1002 = vst [vmem:[#allocation11 + $0x28] sm:$0xff] %v988
    // Predicated region
    $region42: #{tpu_custom_call.1} parent=1 // pred_check
      _
    $region43: #{tpu_custom_call.1} parent=1 // pred_check_branch
      %1004 = sbr.rel (0) target = $region45
    $region44: #{tpu_custom_call.1} parent=1 // pred_region
      %1006 = vsyncadd [#allocation4], 0
      %s1007 = sshll.u32 [#allocation11], 4
      %s1008 = int_to_ptr.vmem [resolvable:$true] %s1007
      %s1009 = sshll.u32 %s5, 4
      %s1010 = int_to_ptr.hbm [resolvable:$true] %s1009
      %1015 = dma.vmem_to_hbm [thread:$0]  %s1008, 768, %s1010, [#allocation4], 384, 384, 24
    $region45: #{tpu_custom_call.1} parent=1 // pred_fallthru
      _
    // Predicated region
    $region46: #{tpu_custom_call.1} parent=1 // pred_check
      _
    $region47: #{tpu_custom_call.1} parent=1 // pred_check_branch
      %1017 = sbr.rel (0) target = $region49
    $region48: #{tpu_custom_call.1} parent=1 // pred_region
      %1019 = dma.done [#allocation4], 768
    $region49: #{tpu_custom_call.1} parent=1 // pred_fallthru
      _
    %1020 = vsyncpa [#allocation3], 1
    %1021 = vsyncpa [#allocation6], 1
    %1022 = vsyncpa [#allocation9], 1
    %1023 = vsyncpa [#allocation4], 1

</llo_original>
